<compile_context>
chip_gen: v7x
topology: tpu7x:2x2x1
jax: 0.10.0
libtpu: 0.0.40
codegen_flags: <defaults>
</compile_context>

<pallas_src>
import functools

import jax
import jax.numpy as jnp
from jax.experimental import pallas as pl
from jax.experimental.pallas import tpu as pltpu


# ---------------------------------------------------------------------------
# Pallas kernel: TB graph-batches per grid step (block-diagonal adjacency/pool).
# ---------------------------------------------------------------------------
def encoder_kernel(a_ref, p_ref, x_ref, w1_ref, b12_ref, w2_ref,
                   whead_ref, bhead_ref, out_ref):
    a = a_ref[0]                         # [TB*N, TB*N] block-diag normalized adjacency
    x = x_ref[0]                         # [TB*N, C]
    p = p_ref[0]                         # [TB*G, TB*N] block-diag mean-pool matrix
    b1 = b12_ref[0:1, :]                 # [1, H]
    b2 = b12_ref[1:2, :]                 # [1, H]

    # GCNConv 1:  relu( (A_hat @ X) @ W1 + b1 )   -- (A @ X) first since C < H
    ax = jnp.dot(a, x, preferred_element_type=jnp.float32)                 # [TB*N, C]
    h = jnp.dot(ax, w1_ref[...], preferred_element_type=jnp.float32) + b1  # [TB*N, H]
    h = jnp.maximum(h, 0.0)

    # GCNConv 2:  relu( A_hat @ (H @ W2) + b2 )
    hw = jnp.dot(h, w2_ref[...], preferred_element_type=jnp.float32)       # [TB*N, H]
    h = jnp.dot(a, hw, preferred_element_type=jnp.float32) + b2
    h = jnp.maximum(h, 0.0)

    # global_mean_pool for all TB graph-batches at once:  P @ H -> [TB*G, H]
    pooled = jnp.dot(p, h, preferred_element_type=jnp.float32)

    # Fused lane-padded mu|logvar head -> one sublane+lane-dense [TB*G, 128] store.
    out_ref[...] = (jnp.dot(pooled, whead_ref[...],
                            preferred_element_type=jnp.float32)
                    + bhead_ref[...])


# ---------------------------------------------------------------------------
# pallas_call wrapper: a_blk [S, TB*N, TB*N], pool_blk [S, TB*G, TB*N],
# x_flat [S, TB*N, C]; weights stay resident across the S grid steps.
# ---------------------------------------------------------------------------
def _encoder_pallas(a_blk, pool_blk, x_flat, w1, b12, w2, w_head, b_head):
    S, BN, _ = a_blk.shape               # S grid steps, BN = TB*N rows per step
    BG = pool_blk.shape[1]               # TB*G pooled rows per step
    C = x_flat.shape[2]
    H = w1.shape[1]
    P = w_head.shape[1]                  # lane-padded fused-head width (>=128)

    lead3 = lambda s: (s, 0, 0)          # per-grid-step operands
    const2 = lambda s: (0, 0)            # weights: same block every step (resident)

    return pl.pallas_call(
        encoder_kernel,
        out_shape=jax.ShapeDtypeStruct((S * BG, P), jnp.float32),
        grid_spec=pltpu.PrefetchScalarGridSpec(
            num_scalar_prefetch=0,
            grid=(S,),
            in_specs=[
                pl.BlockSpec((1, BN, BN), lead3),   # block-diag a_hat
                pl.BlockSpec((1, BG, BN), lead3),   # block-diag pool
                pl.BlockSpec((1, BN, C), lead3),    # x
                pl.BlockSpec((C, H), const2),       # w1
                pl.BlockSpec((2, H), const2),       # b1|b2
                pl.BlockSpec((H, H), const2),       # w2
                pl.BlockSpec((H, P), const2),       # wmu|wlv (lane padded)
                pl.BlockSpec((1, P), const2),       # bmu|blv (lane padded)
            ],
            out_specs=pl.BlockSpec((BG, P), lambda s: (s, 0)),
        ),
        compiler_params=pltpu.CompilerParams(
            dimension_semantics=("parallel",)),     # shard grid steps across TCs (v7x)
    )(a_blk, pool_blk, x_flat, w1, b12, w2, w_head, b_head)


# ---------------------------------------------------------------------------
# JAX glue: dense graph operands, one-time parameter packing, block-diag packing.
# ---------------------------------------------------------------------------
def _dense_graph_operands(x, edge_index, batch, num_graphs):
    n = x.shape[0]
    src, dst = edge_index[0], edge_index[1]
    adj = jnp.zeros((n, n), jnp.float32).at[dst, src].set(1.0)
    adj = adj.at[jnp.arange(n), jnp.arange(n)].set(1.0)            # self loops
    deg = adj.sum(axis=1)
    dinv = jnp.where(deg > 0, 1.0 / jnp.sqrt(deg), 0.0)
    a_hat = dinv[:, None] * adj * dinv[None, :]

    one_hot = (batch[None, :] == jnp.arange(num_graphs)[:, None]).astype(jnp.float32)
    counts = jnp.maximum(one_hot.sum(axis=1, keepdims=True), 1.0)
    pool = one_hot / counts
    return a_hat, pool


def pack_params(params):
    """One-time packing (hoisted out of the per-call path): fuse mu/logvar heads
    into one lane-padded [H, 128] weight + [1, 128] bias and stack b1|b2."""
    H, L = params["wmu"].shape
    P = max(128, ((2 * L + 127) // 128) * 128)
    w_head = jnp.zeros((H, P), jnp.float32)
    w_head = w_head.at[:, :L].set(params["wmu"]).at[:, L:2 * L].set(params["wlv"])
    b_head = jnp.zeros((1, P), jnp.float32)
    b_head = b_head.at[:, :L].set(params["bmu"]).at[:, L:2 * L].set(params["blv"])
    b12 = jnp.concatenate([params["b1"], params["b2"]], axis=0)     # [2, H]
    packed = (params["w1"], b12, params["w2"], w_head, b_head)
    return packed, L


def _block_diag_operands(a_hat_b, pool_b, x_b, tb):
    """Group tb graph-batches per grid step into block-diagonal operands."""
    B, N, _ = a_hat_b.shape
    G = pool_b.shape[1]
    C = x_b.shape[2]
    S = B // tb
    eye = jnp.eye(tb, dtype=jnp.float32)
    a_blk = jnp.einsum('stij,tu->stiuj', a_hat_b.reshape(S, tb, N, N),
                       eye).reshape(S, tb * N, tb * N)
    pool_blk = jnp.einsum('stgn,tu->stgun', pool_b.reshape(S, tb, G, N),
                          eye).reshape(S, tb * G, tb * N)
    x_flat = x_b.reshape(S, tb * N, C)
    return a_blk, pool_blk, x_flat


# ---------------------------------------------------------------------------
# Jitted forward passes.
# ---------------------------------------------------------------------------
@functools.partial(jax.jit, static_argnames=("num_graphs", "latent"))
def encoder_forward(x, edge_index, batch, packed, num_graphs, latent):
    """Same semantics as Encoder.forward for one (x, edge_index, batch)."""
    a_hat, pool = _dense_graph_operands(x, edge_index, batch, num_graphs)
    out = _encoder_pallas(a_hat[None], pool[None], x[None], *packed)   # [G, 128]
    return out[:, :latent], out[:, latent:2 * latent]


@functools.partial(jax.jit, static_argnames=("latent", "tb"))
def encoder_forward_batched(a_hat_b, pool_b, x_b, packed, latent, tb):
    """B independent graph-batches, tb packed per grid step (B % tb == 0)."""
    B = a_hat_b.shape[0]
    G = pool_b.shape[1]
    a_blk, pool_blk, x_flat = _block_diag_operands(a_hat_b, pool_b, x_b, tb)
    out = _encoder_pallas(a_blk, pool_blk, x_flat, *packed)            # [B*G, 128]
    out = out.reshape(B, G, -1)
    return out[..., :latent], out[..., latent:2 * latent]


# ---------------------------------------------------------------------------
# Pure-JAX reference.
# ---------------------------------------------------------------------------
def reference_forward(x, edge_index, batch, params, num_graphs):
    a_hat, pool = _dense_graph_operands(x, edge_index, batch, num_graphs)
    h = jnp.maximum(a_hat @ (x @ params["w1"]) + params["b1"], 0.0)
    h = jnp.maximum(a_hat @ (h @ params["w2"]) + params["b2"], 0.0)
    pooled = pool @ h
    mu = pooled @ params["wmu"] + params["bmu"]
    logvar = pooled @ params["wlv"] + params["blv"]
    return mu, logvar


if __name__ == "__main__":
    in_channels, hidden_channels, latent_dim = 8, 32, 16
    nodes_per_graph, num_graphs = 8, 2
    n_nodes = nodes_per_graph * num_graphs

    key = jax.random.PRNGKey(0)
    keys = jax.random.split(key, 12)

    # Deterministic synthetic parameters (stored as [in, out]).
    params = {
        "w1":  0.1 * jax.random.normal(keys[0], (in_channels, hidden_channels), jnp.float32),
        "b1":  0.1 * jax.random.normal(keys[1], (1, hidden_channels), jnp.float32),
        "w2":  0.1 * jax.random.normal(keys[2], (hidden_channels, hidden_channels), jnp.float32),
        "b2":  0.1 * jax.random.normal(keys[3], (1, hidden_channels), jnp.float32),
        "wmu": 0.1 * jax.random.normal(keys[4], (hidden_channels, latent_dim), jnp.float32),
        "bmu": 0.1 * jax.random.normal(keys[5], (1, latent_dim), jnp.float32),
        "wlv": 0.1 * jax.random.normal(keys[6], (hidden_channels, latent_dim), jnp.float32),
        "blv": 0.1 * jax.random.normal(keys[7], (1, latent_dim), jnp.float32),
    }
    packed, latent = pack_params(params)          # hoisted: packed exactly once

    # Node features for one graph-batch.
    x = jax.random.normal(keys[8], (n_nodes, in_channels), jnp.float32)

    # Two disjoint ring graphs of 8 nodes each, undirected (both directions).
    edges = []
    for g in range(num_graphs):
        base = g * nodes_per_graph
        for i in range(nodes_per_graph):
            a, b = base + i, base + (i + 1) % nodes_per_graph
            edges.append((a, b))
            edges.append((b, a))
    edge_index = jnp.array(edges, dtype=jnp.int32).T                       # [2, E]
    batch = jnp.repeat(jnp.arange(num_graphs, dtype=jnp.int32), nodes_per_graph)  # [N]

    # --- single graph-batch (module semantics) ---
    mu, logvar = encoder_forward(x, edge_index, batch, packed, num_graphs, latent)
    mu = jax.block_until_ready(mu)
    logvar = jax.block_until_ready(logvar)

    mu_ref, lv_ref = reference_forward(x, edge_index, batch, params, num_graphs)
    assert mu.shape == (num_graphs, latent_dim) and logvar.shape == (num_graphs, latent_dim)
    assert jnp.allclose(mu, mu_ref, atol=1e-4), "mu mismatch vs reference"
    assert jnp.allclose(logvar, lv_ref, atol=1e-4), "logvar mismatch vs reference"

    # --- batched path: B=16 graph-batches, TB=8 per grid step -> grid=(2,) ---
    B, TB = 16, 8
    x_b = jax.random.normal(keys[9], (B, n_nodes, in_channels), jnp.float32)
    a_hat1, pool1 = _dense_graph_operands(x, edge_index, batch, num_graphs)
    a_hat_b = jnp.broadcast_to(a_hat1[None], (B, n_nodes, n_nodes))
    pool_b = jnp.broadcast_to(pool1[None], (B, num_graphs, n_nodes))

    mu_b, lv_b = encoder_forward_batched(a_hat_b, pool_b, x_b, packed, latent, TB)
    mu_b = jax.block_until_ready(mu_b)
    lv_b = jax.block_until_ready(lv_b)
    for bi in range(B):
        mr, lr = reference_forward(x_b[bi], edge_index, batch, params, num_graphs)
        assert jnp.allclose(mu_b[bi], mr, atol=1e-4), "batched mu mismatch"
        assert jnp.allclose(lv_b[bi], lr, atol=1e-4), "batched logvar mismatch"

    print("KERNEL_OK")
</pallas_src>

<mosaic_0001>
module attributes {stable_mosaic.version = 11 : i64} {
  func.func @encoder_kernel(%arg0: i32, %arg1: memref<1x16x16xf32, #tpu.memory_space<vmem>>, %arg2: memref<1x2x16xf32, #tpu.memory_space<vmem>>, %arg3: memref<1x16x8xf32, #tpu.memory_space<vmem>>, %arg4: memref<8x32xf32, #tpu.memory_space<vmem>>, %arg5: memref<2x32xf32, #tpu.memory_space<vmem>>, %arg6: memref<32x32xf32, #tpu.memory_space<vmem>>, %arg7: memref<32x128xf32, #tpu.memory_space<vmem>>, %arg8: memref<1x128xf32, #tpu.memory_space<vmem>>, %arg9: memref<2x128xf32, #tpu.memory_space<vmem>>) attributes {dimension_semantics = [#tpu.dimension_semantics<parallel>], iteration_bounds = array<i64: 1>, scalar_prefetch = 0 : i64, scratch_operands = 0 : i64, tpu.core_type = #tpu.core_type<tc>, window_params = [{transform_indices = @transform_0, window_bounds = array<i64: 1, 16, 16>}, {transform_indices = @transform_1, window_bounds = array<i64: 1, 2, 16>}, {transform_indices = @transform_2, window_bounds = array<i64: 1, 16, 8>}, {pipeline_mode = #tpu.pipeline_mode<synchronous>, transform_indices = @transform_3, window_bounds = array<i64: 8, 32>}, {pipeline_mode = #tpu.pipeline_mode<synchronous>, transform_indices = @transform_4, window_bounds = array<i64: 2, 32>}, {pipeline_mode = #tpu.pipeline_mode<synchronous>, transform_indices = @transform_5, window_bounds = array<i64: 32, 32>}, {pipeline_mode = #tpu.pipeline_mode<synchronous>, transform_indices = @transform_6, window_bounds = array<i64: 32, 128>}, {pipeline_mode = #tpu.pipeline_mode<synchronous>, transform_indices = @transform_7, window_bounds = array<i64: 1, 128>}, {transform_indices = @transform_8, window_bounds = array<i64: 2, 128>}]} {
    %c0 = arith.constant 0 : index
    %c0_0 = arith.constant 0 : index
    %c0_1 = arith.constant 0 : index
    %0 = vector.load %arg1[%c0, %c0_0, %c0_1] : memref<1x16x16xf32, #tpu.memory_space<vmem>>, vector<1x16x16xf32>
    %1 = vector.shape_cast %0 : vector<1x16x16xf32> to vector<16x16xf32>
    %c0_2 = arith.constant 0 : index
    %c0_3 = arith.constant 0 : index
    %c0_4 = arith.constant 0 : index
    %2 = vector.load %arg3[%c0_2, %c0_3, %c0_4] : memref<1x16x8xf32, #tpu.memory_space<vmem>>, vector<1x16x8xf32>
    %3 = vector.shape_cast %2 : vector<1x16x8xf32> to vector<16x8xf32>
    %c0_5 = arith.constant 0 : index
    %c0_6 = arith.constant 0 : index
    %c0_7 = arith.constant 0 : index
    %4 = vector.load %arg2[%c0_5, %c0_6, %c0_7] : memref<1x2x16xf32, #tpu.memory_space<vmem>>, vector<1x2x16xf32>
    %5 = vector.shape_cast %4 : vector<1x2x16xf32> to vector<2x16xf32>
    %c0_8 = arith.constant 0 : index
    %c0_9 = arith.constant 0 : index
    %6 = vector.load %arg5[%c0_8, %c0_9] : memref<2x32xf32, #tpu.memory_space<vmem>>, vector<1x32xf32>
    %c1 = arith.constant 1 : index
    %c0_10 = arith.constant 0 : index
    %7 = vector.load %arg5[%c1, %c0_10] : memref<2x32xf32, #tpu.memory_space<vmem>>, vector<1x32xf32>
    %cst = arith.constant dense<0.000000e+00> : vector<16x8xf32>
    %8 = tpu.matmul %1, %3, %cst {dimension_numbers = #tpu.dot_dimension_numbers<[1], [0], [0], [1], [0, 0, 1, 1], [], []>} : vector<16x16xf32>, vector<16x8xf32>, vector<16x8xf32> -> vector<16x8xf32>
    %c0_11 = arith.constant 0 : index
    %c0_12 = arith.constant 0 : index
    %9 = vector.load %arg4[%c0_11, %c0_12] : memref<8x32xf32, #tpu.memory_space<vmem>>, vector<8x32xf32>
    %cst_13 = arith.constant dense<0.000000e+00> : vector<16x32xf32>
    %10 = tpu.matmul %8, %9, %cst_13 {dimension_numbers = #tpu.dot_dimension_numbers<[1], [0], [0], [1], [0, 0, 1, 1], [], []>} : vector<16x8xf32>, vector<8x32xf32>, vector<16x32xf32> -> vector<16x32xf32>
    %11 = vector.broadcast %6 : vector<1x32xf32> to vector<16x32xf32>
    %12 = arith.addf %10, %11 : vector<16x32xf32>
    %cst_14 = arith.constant 0.000000e+00 : f32
    %13 = vector.broadcast %cst_14 : f32 to vector<16x32xf32>
    %14 = arith.maximumf %12, %13 : vector<16x32xf32>
    %c0_15 = arith.constant 0 : index
    %c0_16 = arith.constant 0 : index
    %15 = vector.load %arg6[%c0_15, %c0_16] : memref<32x32xf32, #tpu.memory_space<vmem>>, vector<32x32xf32>
    %cst_17 = arith.constant dense<0.000000e+00> : vector<16x32xf32>
    %16 = tpu.matmul %14, %15, %cst_17 {dimension_numbers = #tpu.dot_dimension_numbers<[1], [0], [0], [1], [0, 0, 1, 1], [], []>} : vector<16x32xf32>, vector<32x32xf32>, vector<16x32xf32> -> vector<16x32xf32>
    %cst_18 = arith.constant dense<0.000000e+00> : vector<16x32xf32>
    %17 = tpu.matmul %1, %16, %cst_18 {dimension_numbers = #tpu.dot_dimension_numbers<[1], [0], [0], [1], [0, 0, 1, 1], [], []>} : vector<16x16xf32>, vector<16x32xf32>, vector<16x32xf32> -> vector<16x32xf32>
    %18 = vector.broadcast %7 : vector<1x32xf32> to vector<16x32xf32>
    %19 = arith.addf %17, %18 : vector<16x32xf32>
    %cst_19 = arith.constant 0.000000e+00 : f32
    %20 = vector.broadcast %cst_19 : f32 to vector<16x32xf32>
    %21 = arith.maximumf %19, %20 : vector<16x32xf32>
    %cst_20 = arith.constant dense<0.000000e+00> : vector<2x32xf32>
    %22 = tpu.matmul %5, %21, %cst_20 {dimension_numbers = #tpu.dot_dimension_numbers<[1], [0], [0], [1], [0, 0, 1, 1], [], []>} : vector<2x16xf32>, vector<16x32xf32>, vector<2x32xf32> -> vector<2x32xf32>
    %c0_21 = arith.constant 0 : index
    %c0_22 = arith.constant 0 : index
    %23 = vector.load %arg7[%c0_21, %c0_22] : memref<32x128xf32, #tpu.memory_space<vmem>>, vector<32x128xf32>
    %cst_23 = arith.constant dense<0.000000e+00> : vector<2x128xf32>
    %24 = tpu.matmul %22, %23, %cst_23 {dimension_numbers = #tpu.dot_dimension_numbers<[1], [0], [0], [1], [0, 0, 1, 1], [], []>} : vector<2x32xf32>, vector<32x128xf32>, vector<2x128xf32> -> vector<2x128xf32>
    %c0_24 = arith.constant 0 : index
    %c0_25 = arith.constant 0 : index
    %25 = vector.load %arg8[%c0_24, %c0_25] : memref<1x128xf32, #tpu.memory_space<vmem>>, vector<1x128xf32>
    %26 = vector.broadcast %25 : vector<1x128xf32> to vector<2x128xf32>
    %27 = arith.addf %24, %26 : vector<2x128xf32>
    %c0_26 = arith.constant 0 : index
    %c0_27 = arith.constant 0 : index
    %28 = vector.load %arg9[%c0_26, %c0_27] : memref<2x128xf32, #tpu.memory_space<vmem>>, vector<2x128xf32>
    tpu.vector_store %arg9[%c0_26, %c0_27], %27 {strides = array<i32>} : memref<2x128xf32, #tpu.memory_space<vmem>>, vector<2x128xf32>,
    return
  }
  func.func @transform_0(%arg0: i32) -> (i32, i32, i32) {
    %c0_i32 = arith.constant 0 : i32
    %c0_i32_0 = arith.constant 0 : i32
    %c0_i32_1 = arith.constant 0 : i32
    return %arg0, %c0_i32, %c0_i32_0 : i32, i32, i32
  }
  func.func @transform_1(%arg0: i32) -> (i32, i32, i32) {
    %c0_i32 = arith.constant 0 : i32
    %c0_i32_0 = arith.constant 0 : i32
    %c0_i32_1 = arith.constant 0 : i32
    return %arg0, %c0_i32, %c0_i32_0 : i32, i32, i32
  }
  func.func @transform_2(%arg0: i32) -> (i32, i32, i32) {
    %c0_i32 = arith.constant 0 : i32
    %c0_i32_0 = arith.constant 0 : i32
    %c0_i32_1 = arith.constant 0 : i32
    return %arg0, %c0_i32, %c0_i32_0 : i32, i32, i32
  }
  func.func @transform_3(%arg0: i32) -> (i32, i32) {
    %c0_i32 = arith.constant 0 : i32
    %c0_i32_0 = arith.constant 0 : i32
    %c0_i32_1 = arith.constant 0 : i32
    return %c0_i32, %c0_i32_0 : i32, i32
  }
  func.func @transform_4(%arg0: i32) -> (i32, i32) {
    %c0_i32 = arith.constant 0 : i32
    %c0_i32_0 = arith.constant 0 : i32
    %c0_i32_1 = arith.constant 0 : i32
    return %c0_i32, %c0_i32_0 : i32, i32
  }
  func.func @transform_5(%arg0: i32) -> (i32, i32) {
    %c0_i32 = arith.constant 0 : i32
    %c0_i32_0 = arith.constant 0 : i32
    %c0_i32_1 = arith.constant 0 : i32
    return %c0_i32, %c0_i32_0 : i32, i32
  }
  func.func @transform_6(%arg0: i32) -> (i32, i32) {
    %c0_i32 = arith.constant 0 : i32
    %c0_i32_0 = arith.constant 0 : i32
    %c0_i32_1 = arith.constant 0 : i32
    return %c0_i32, %c0_i32_0 : i32, i32
  }
  func.func @transform_7(%arg0: i32) -> (i32, i32) {
    %c0_i32 = arith.constant 0 : i32
    %c0_i32_0 = arith.constant 0 : i32
    %c0_i32_1 = arith.constant 0 : i32
    return %c0_i32, %c0_i32_0 : i32, i32
  }
  func.func @transform_8(%arg0: i32) -> (i32, i32) {
    %c0_i32 = arith.constant 0 : i32
    %c0_i32_0 = arith.constant 0 : i32
    return %arg0, %c0_i32 : i32, i32
  }
}

</mosaic_0001>

<llo_original>
// kernel: encoder_forward.1
$region0: #{encoder_forward.1}
  #allocation0 [shape = 'u32[]', space=smem, size = 0x4, offset = 0x4, fixed_abs, tag = 'smem constant byte address 0x4 - core index']
  #allocation1 [shape = 'u32[144,128]{1,0:T(1,128)}', space=vmem, size = 0x12000, scoped, tag = 'internal scratch']
  %s0 = inlined_call_operand.vmem [shape: f32[1,16,16], index: 0, kind: input, shape index: {}]
  %s1 = inlined_call_operand.vmem [shape: f32[1,2,16], index: 1, kind: input, shape index: {}]
  %s2 = inlined_call_operand.vmem [shape: f32[1,16,8], index: 2, kind: input, shape index: {}]
  %s3 = inlined_call_operand.vmem [shape: f32[8,32], index: 3, kind: input, shape index: {}]
  %s4 = inlined_call_operand.vmem [shape: f32[2,32], index: 4, kind: input, shape index: {}]
  %s5 = inlined_call_operand.vmem [shape: f32[32,32], index: 5, kind: input, shape index: {}]
  %s6 = inlined_call_operand.vmem [shape: f32[32,128], index: 6, kind: input, shape index: {}]
  %s7 = inlined_call_operand.vmem [shape: f32[1,128], index: 7, kind: input, shape index: {}]
  %s8 = inlined_call_operand.vmem [shape: f32[2,128], index: 8, kind: output, shape index: {}]
  %s9 = sld [smem:[#allocation0]]
  $region42: #{encoder_forward.1} parent=0
    _
  %s11 = ssub.s32 1, %s9
  %s12 = scalar_select 0, %s11, %s9
  // Predicated region
  $region2: #{encoder_forward.1} parent=0 // pred_check
    _
  $region3: #{encoder_forward.1} parent=0 // pred_check_branch
    %14 = sbr.rel (0) target = $region5
  $region4: #{encoder_forward.1} parent=0 // pred_region
    _
  $region5: #{encoder_forward.1} parent=0 // pred_fallthru
    _
  // Predicated region
  $region6: #{encoder_forward.1} parent=0 // pred_check
    _
  $region7: #{encoder_forward.1} parent=0 // pred_check_branch
    %16 = sbr.rel (0) target = $region9
  $region8: #{encoder_forward.1} parent=0 // pred_region
    _
  $region9: #{encoder_forward.1} parent=0 // pred_fallthru
    _
  // Predicated region
  $region10: #{encoder_forward.1} parent=0 // pred_check
    _
  $region11: #{encoder_forward.1} parent=0 // pred_check_branch
    %18 = sbr.rel (0) target = $region13
  $region12: #{encoder_forward.1} parent=0 // pred_region
    _
  $region13: #{encoder_forward.1} parent=0 // pred_fallthru
    _
  // Predicated region
  $region14: #{encoder_forward.1} parent=0 // pred_check
    _
  $region15: #{encoder_forward.1} parent=0 // pred_check_branch
    %20 = sbr.rel (0) target = $region17
  $region16: #{encoder_forward.1} parent=0 // pred_region
    _
  $region17: #{encoder_forward.1} parent=0 // pred_fallthru
    _
  // Predicated region
  $region18: #{encoder_forward.1} parent=0 // pred_check
    _
  $region19: #{encoder_forward.1} parent=0 // pred_check_branch
    %22 = sbr.rel (0) target = $region21
  $region20: #{encoder_forward.1} parent=0 // pred_region
    _
  $region21: #{encoder_forward.1} parent=0 // pred_fallthru
    _
  // Predicated region
  $region22: #{encoder_forward.1} parent=0 // pred_check
    _
  $region23: #{encoder_forward.1} parent=0 // pred_check_branch
    %24 = sbr.rel (0) target = $region25
  $region24: #{encoder_forward.1} parent=0 // pred_region
    _
  $region25: #{encoder_forward.1} parent=0 // pred_fallthru
    _
  // Predicated region
  $region26: #{encoder_forward.1} parent=0 // pred_check
    _
  $region27: #{encoder_forward.1} parent=0 // pred_check_branch
    %26 = sbr.rel (0) target = $region29
  $region28: #{encoder_forward.1} parent=0 // pred_region
    _
  $region29: #{encoder_forward.1} parent=0 // pred_fallthru
    _
  // Predicated region
  $region30: #{encoder_forward.1} parent=0 // pred_check
    _
  $region31: #{encoder_forward.1} parent=0 // pred_check_branch
    %28 = sbr.rel (0) target = $region33
  $region32: #{encoder_forward.1} parent=0 // pred_region
    _
  $region33: #{encoder_forward.1} parent=0 // pred_fallthru
    _
  %v29 = vld [vmem:[%s0] sm:$0xff]
  %v30 = vld [vmem:[%s0 + $0x8] sm:$0xff]
  %v31 = vld [vmem:[%s2] sm:$0xff]
  %v32 = vld [vmem:[%s2 + $0x8] sm:$0xff]
  %v33 = vld [vmem:[%s1] sm:$0x3]
  %v34 = vld [vmem:[%s4] sm:$0x1]
  %v35 = vld [vmem:[%s4 + $0x1] sm:$0x1]
  %vm36 = vcmask 130048
  %v38 = vsel %vm36, %v29, 0
  %v41 = vsel %vm36, %v30, 0
  %43 = vmatprep.subr.mxu0 0.0
  %44 = vmatpush1.msra.mxu0 %v31
  %45 = vmatprep.subr.mxu0 0.0
  %46 = vmatpush1.msra.mxu0 %v32
  %47 = vmatprep.subr.mxu0 0.0
  %48 = vmatpush1.msra.mxu0 0.0
  %49 = vmatprep.subr.mxu0 0.0
  %50 = vmatpush1.msra.mxu0 0.0
  %51 = vmatprep.subr.mxu0 0.0
  %52 = vmatpush1.msra.mxu0 0.0
  %53 = vmatprep.subr.mxu0 0.0
  %54 = vmatpush1.msra.mxu0 0.0
  %55 = vmatprep.subr.mxu0 0.0
  %56 = vmatpush1.msra.mxu0 0.0
  %57 = vmatprep.subr.mxu0 0.0
  %58 = vmatpush1.msra.mxu0 0.0
  %59 = vmatprep.subr.mxu0 0.0
  %60 = vmatpush1.msra.mxu0 0.0
  %61 = vmatprep.subr.mxu0 0.0
  %62 = vmatpush1.msra.mxu0 0.0
  %63 = vmatprep.subr.mxu0 0.0
  %64 = vmatpush1.msra.mxu0 0.0
  %65 = vmatprep.subr.mxu0 0.0
  %66 = vmatpush1.msra.mxu0 0.0
  %67 = vmatprep.subr.mxu0 0.0
  %68 = vmatpush1.msra.mxu0 0.0
  %69 = vmatprep.subr.mxu0 0.0
  %70 = vmatpush1.msra.mxu0 0.0
  %71 = vmatprep.subr.mxu0 0.0
  %72 = vmatpush1.msra.mxu0 0.0
  %73 = vmatprep.subr.mxu0 0.0
  %74 = vmatpush1.msra.mxu0 0.0
  %75 = vmatprep.subr.mxu0 0.0
  %76 = vmatpush1.msra.mxu0 0.0
  %77 = vmatprep.subr.mxu0 0.0
  %78 = vmatpush1.msra.mxu0 0.0
  %79 = vmatprep.subr.mxu0 0.0
  %80 = vmatpush1.msra.mxu0 0.0
  %81 = vmatprep.subr.mxu0 0.0
  %82 = vmatpush1.msra.mxu0 0.0
  %83 = vmatprep.subr.mxu0 0.0
  %84 = vmatpush1.msra.mxu0 0.0
  %85 = vmatprep.subr.mxu0 0.0
  %86 = vmatpush1.msra.mxu0 0.0
  %87 = vmatprep.subr.mxu0 0.0
  %88 = vmatpush1.msra.mxu0 0.0
  %89 = vmatprep.subr.mxu0 0.0
  %90 = vmatpush1.msra.mxu0 0.0
  %91 = vmatprep.subr.mxu0 0.0
  %92 = vmatpush1.msra.mxu0 0.0
  %93 = vmatprep.subr.mxu0 0.0
  %94 = vmatpush1.msra.mxu0 0.0
  %95 = vmatprep.subr.mxu0 0.0
  %96 = vmatpush1.msra.mxu0 0.0
  %97 = vmatprep.subr.mxu0 0.0
  %98 = vmatpush1.msra.mxu0 0.0
  %99 = vmatprep.subr.mxu0 0.0
  %100 = vmatpush1.msra.mxu0 0.0
  %101 = vmatprep.subr.mxu0 0.0
  %102 = vmatpush1.msra.mxu0 0.0
  %103 = vmatprep.subr.mxu0 0.0
  %104 = vmatpush1.msra.mxu0 0.0
  %105 = vmatprep.subr.mxu0 0.0
  %106 = vmatpush1.msra.mxu0 0.0
  %107 = vmatprep.mubr.f32.mxu0 0.0
  %108 = vmatmul.mubr.f32.gmra.mrb[0].mxu0 %v38
  %v109 = vpop.f32.mrb[0].mxu0
  %v110 = vadd.f32 0.0, %v109
  %v111 = vpop.f32.mrb[0].mxu0
  %112 = vmatprep.mubr.f32.mxu0 0.0
  %113 = vmatmul.mubr.f32.gmra.mrb[0].mxu0 %v41
  %v114 = vpop.f32.mrb[0].mxu0
  %v115 = vadd.f32 0.0, %v114
  %v116 = vpop.f32.mrb[0].mxu0
  %117 = vdwg.mxu0
  %v118 = vld [vmem:[%s3] sm:$0xff]
  %v119 = vlaneseq
  %v120 = vshrl.u32 %v119, 7
  %v121 = vsub.s32 0, %v120
  %v122 = vrot.slane %v34, %v121
  %vm123 = vcmask 64512
  %v125 = vsel %vm123, %v110, 0
  %v128 = vsel %vm123, %v115, 0
  %130 = vmatprep.subr.mxu0 0.0
  %131 = vmatpush1.msra.mxu0 %v118
  %132 = vmatprep.subr.mxu0 0.0
  %133 = vmatpush1.msra.mxu0 0.0
  %134 = vmatprep.subr.mxu0 0.0
  %135 = vmatpush1.msra.mxu0 0.0
  %136 = vmatprep.subr.mxu0 0.0
  %137 = vmatpush1.msra.mxu0 0.0
  %138 = vmatprep.subr.mxu0 0.0
  %139 = vmatpush1.msra.mxu0 0.0
  %140 = vmatprep.subr.mxu0 0.0
  %141 = vmatpush1.msra.mxu0 0.0
  %142 = vmatprep.subr.mxu0 0.0
  %143 = vmatpush1.msra.mxu0 0.0
  %144 = vmatprep.subr.mxu0 0.0
  %145 = vmatpush1.msra.mxu0 0.0
  %146 = vmatprep.subr.mxu0 0.0
  %147 = vmatpush1.msra.mxu0 0.0
  %148 = vmatprep.subr.mxu0 0.0
  %149 = vmatpush1.msra.mxu0 0.0
  %150 = vmatprep.subr.mxu0 0.0
  %151 = vmatpush1.msra.mxu0 0.0
  %152 = vmatprep.subr.mxu0 0.0
  %153 = vmatpush1.msra.mxu0 0.0
  %154 = vmatprep.subr.mxu0 0.0
  %155 = vmatpush1.msra.mxu0 0.0
  %156 = vmatprep.subr.mxu0 0.0
  %157 = vmatpush1.msra.mxu0 0.0
  %158 = vmatprep.subr.mxu0 0.0
  %159 = vmatpush1.msra.mxu0 0.0
  %160 = vmatprep.subr.mxu0 0.0
  %161 = vmatpush1.msra.mxu0 0.0
  %162 = vmatprep.subr.mxu0 0.0
  %163 = vmatpush1.msra.mxu0 0.0
  %164 = vmatprep.subr.mxu0 0.0
  %165 = vmatpush1.msra.mxu0 0.0
  %166 = vmatprep.subr.mxu0 0.0
  %167 = vmatpush1.msra.mxu0 0.0
  %168 = vmatprep.subr.mxu0 0.0
  %169 = vmatpush1.msra.mxu0 0.0
  %170 = vmatprep.subr.mxu0 0.0
  %171 = vmatpush1.msra.mxu0 0.0
  %172 = vmatprep.subr.mxu0 0.0
  %173 = vmatpush1.msra.mxu0 0.0
  %174 = vmatprep.subr.mxu0 0.0
  %175 = vmatpush1.msra.mxu0 0.0
  %176 = vmatprep.subr.mxu0 0.0
  %177 = vmatpush1.msra.mxu0 0.0
  %178 = vmatprep.subr.mxu0 0.0
  %179 = vmatpush1.msra.mxu0 0.0
  %180 = vmatprep.subr.mxu0 0.0
  %181 = vmatpush1.msra.mxu0 0.0
  %182 = vmatprep.subr.mxu0 0.0
  %183 = vmatpush1.msra.mxu0 0.0
  %184 = vmatprep.subr.mxu0 0.0
  %185 = vmatpush1.msra.mxu0 0.0
  %186 = vmatprep.subr.mxu0 0.0
  %187 = vmatpush1.msra.mxu0 0.0
  %188 = vmatprep.subr.mxu0 0.0
  %189 = vmatpush1.msra.mxu0 0.0
  %190 = vmatprep.subr.mxu0 0.0
  %191 = vmatpush1.msra.mxu0 0.0
  %192 = vmatprep.subr.mxu0 0.0
  %193 = vmatpush1.msra.mxu0 0.0
  %194 = vmatprep.mubr.f32.mxu0 0.0
  %195 = vmatmul.mubr.f32.gmra.mrb[0].mxu0 %v125
  %v196 = vpop.f32.mrb[0].mxu0
  %v197 = vadd.f32 %v122, %v196
  %v198 = vpop.f32.mrb[0].mxu0
  %199 = vmatprep.mubr.f32.mxu0 0.0
  %200 = vmatmul.mubr.f32.gmra.mrb[0].mxu0 %v128
  %v201 = vpop.f32.mrb[0].mxu0
  %v202 = vadd.f32 %v122, %v201
  %v203 = vpop.f32.mrb[0].mxu0
  %204 = vdwg.mxu0
  %v205 = vmax.f32 %v197, 0.0
  %v206 = vmax.f32 %v202, 0.0
  %v207 = vld [vmem:[%s5] sm:$0xff]
  %v208 = vld [vmem:[%s5 + $0x8] sm:$0xff]
  %v209 = vld [vmem:[%s5 + $0x10] sm:$0xff]
  %v210 = vld [vmem:[%s5 + $0x18] sm:$0xff]
  %vm211 = vcmask 261120
  %v213 = vsel %vm211, %v205, 0
  %v216 = vsel %vm211, %v206, 0
  %218 = vmatprep.subr.mxu0 0.0
  %219 = vmatpush1.msra.mxu0 %v207
  %220 = vmatprep.subr.mxu0 0.0
  %221 = vmatpush1.msra.mxu0 %v208
  %222 = vmatprep.subr.mxu0 0.0
  %223 = vmatpush1.msra.mxu0 %v209
  %224 = vmatprep.subr.mxu0 0.0
  %225 = vmatpush1.msra.mxu0 %v210
  %226 = vmatprep.subr.mxu0 0.0
  %227 = vmatpush1.msra.mxu0 0.0
  %228 = vmatprep.subr.mxu0 0.0
  %229 = vmatpush1.msra.mxu0 0.0
  %230 = vmatprep.subr.mxu0 0.0
  %231 = vmatpush1.msra.mxu0 0.0
  %232 = vmatprep.subr.mxu0 0.0
  %233 = vmatpush1.msra.mxu0 0.0
  %234 = vmatprep.subr.mxu0 0.0
  %235 = vmatpush1.msra.mxu0 0.0
  %236 = vmatprep.subr.mxu0 0.0
  %237 = vmatpush1.msra.mxu0 0.0
  %238 = vmatprep.subr.mxu0 0.0
  %239 = vmatpush1.msra.mxu0 0.0
  %240 = vmatprep.subr.mxu0 0.0
  %241 = vmatpush1.msra.mxu0 0.0
  %242 = vmatprep.subr.mxu0 0.0
  %243 = vmatpush1.msra.mxu0 0.0
  %244 = vmatprep.subr.mxu0 0.0
  %245 = vmatpush1.msra.mxu0 0.0
  %246 = vmatprep.subr.mxu0 0.0
  %247 = vmatpush1.msra.mxu0 0.0
  %248 = vmatprep.subr.mxu0 0.0
  %249 = vmatpush1.msra.mxu0 0.0
  %250 = vmatprep.subr.mxu0 0.0
  %251 = vmatpush1.msra.mxu0 0.0
  %252 = vmatprep.subr.mxu0 0.0
  %253 = vmatpush1.msra.mxu0 0.0
  %254 = vmatprep.subr.mxu0 0.0
  %255 = vmatpush1.msra.mxu0 0.0
  %256 = vmatprep.subr.mxu0 0.0
  %257 = vmatpush1.msra.mxu0 0.0
  %258 = vmatprep.subr.mxu0 0.0
  %259 = vmatpush1.msra.mxu0 0.0
  %260 = vmatprep.subr.mxu0 0.0
  %261 = vmatpush1.msra.mxu0 0.0
  %262 = vmatprep.subr.mxu0 0.0
  %263 = vmatpush1.msra.mxu0 0.0
  %264 = vmatprep.subr.mxu0 0.0
  %265 = vmatpush1.msra.mxu0 0.0
  %266 = vmatprep.subr.mxu0 0.0
  %267 = vmatpush1.msra.mxu0 0.0
  %268 = vmatprep.subr.mxu0 0.0
  %269 = vmatpush1.msra.mxu0 0.0
  %270 = vmatprep.subr.mxu0 0.0
  %271 = vmatpush1.msra.mxu0 0.0
  %272 = vmatprep.subr.mxu0 0.0
  %273 = vmatpush1.msra.mxu0 0.0
  %274 = vmatprep.subr.mxu0 0.0
  %275 = vmatpush1.msra.mxu0 0.0
  %276 = vmatprep.subr.mxu0 0.0
  %277 = vmatpush1.msra.mxu0 0.0
  %278 = vmatprep.subr.mxu0 0.0
  %279 = vmatpush1.msra.mxu0 0.0
  %280 = vmatprep.subr.mxu0 0.0
  %281 = vmatpush1.msra.mxu0 0.0
  %282 = vmatprep.mubr.f32.mxu0 0.0
  %283 = vmatmul.mubr.f32.gmra.mrb[0].mxu0 %v213
  %v284 = vpop.f32.mrb[0].mxu0
  %v285 = vadd.f32 0.0, %v284
  %v286 = vpop.f32.mrb[0].mxu0
  %287 = vmatprep.mubr.f32.mxu0 0.0
  %288 = vmatmul.mubr.f32.gmra.mrb[0].mxu0 %v216
  %v289 = vpop.f32.mrb[0].mxu0
  %v290 = vadd.f32 0.0, %v289
  %v291 = vpop.f32.mrb[0].mxu0
  %292 = vdwg.mxu0
  %v293 = vlaneseq
  %v294 = vshrl.u32 %v293, 7
  %v295 = vsub.s32 0, %v294
  %v296 = vrot.slane %v35, %v295
  %297 = vmatprep.subr.mxu0 0.0
  %298 = vmatpush1.msra.mxu0 %v285
  %299 = vmatprep.subr.mxu0 0.0
  %300 = vmatpush1.msra.mxu0 %v290
  %301 = vmatprep.subr.mxu0 0.0
  %302 = vmatpush1.msra.mxu0 0.0
  %303 = vmatprep.subr.mxu0 0.0
  %304 = vmatpush1.msra.mxu0 0.0
  %305 = vmatprep.subr.mxu0 0.0
  %306 = vmatpush1.msra.mxu0 0.0
  %307 = vmatprep.subr.mxu0 0.0
  %308 = vmatpush1.msra.mxu0 0.0
  %309 = vmatprep.subr.mxu0 0.0
  %310 = vmatpush1.msra.mxu0 0.0
  %311 = vmatprep.subr.mxu0 0.0
  %312 = vmatpush1.msra.mxu0 0.0
  %313 = vmatprep.subr.mxu0 0.0
  %314 = vmatpush1.msra.mxu0 0.0
  %315 = vmatprep.subr.mxu0 0.0
  %316 = vmatpush1.msra.mxu0 0.0
  %317 = vmatprep.subr.mxu0 0.0
  %318 = vmatpush1.msra.mxu0 0.0
  %319 = vmatprep.subr.mxu0 0.0
  %320 = vmatpush1.msra.mxu0 0.0
  %321 = vmatprep.subr.mxu0 0.0
  %322 = vmatpush1.msra.mxu0 0.0
  %323 = vmatprep.subr.mxu0 0.0
  %324 = vmatpush1.msra.mxu0 0.0
  %325 = vmatprep.subr.mxu0 0.0
  %326 = vmatpush1.msra.mxu0 0.0
  %327 = vmatprep.subr.mxu0 0.0
  %328 = vmatpush1.msra.mxu0 0.0
  %329 = vmatprep.subr.mxu0 0.0
  %330 = vmatpush1.msra.mxu0 0.0
  %331 = vmatprep.subr.mxu0 0.0
  %332 = vmatpush1.msra.mxu0 0.0
  %333 = vmatprep.subr.mxu0 0.0
  %334 = vmatpush1.msra.mxu0 0.0
  %335 = vmatprep.subr.mxu0 0.0
  %336 = vmatpush1.msra.mxu0 0.0
  %337 = vmatprep.subr.mxu0 0.0
  %338 = vmatpush1.msra.mxu0 0.0
  %339 = vmatprep.subr.mxu0 0.0
  %340 = vmatpush1.msra.mxu0 0.0
  %341 = vmatprep.subr.mxu0 0.0
  %342 = vmatpush1.msra.mxu0 0.0
  %343 = vmatprep.subr.mxu0 0.0
  %344 = vmatpush1.msra.mxu0 0.0
  %345 = vmatprep.subr.mxu0 0.0
  %346 = vmatpush1.msra.mxu0 0.0
  %347 = vmatprep.subr.mxu0 0.0
  %348 = vmatpush1.msra.mxu0 0.0
  %349 = vmatprep.subr.mxu0 0.0
  %350 = vmatpush1.msra.mxu0 0.0
  %351 = vmatprep.subr.mxu0 0.0
  %352 = vmatpush1.msra.mxu0 0.0
  %353 = vmatprep.subr.mxu0 0.0
  %354 = vmatpush1.msra.mxu0 0.0
  %355 = vmatprep.subr.mxu0 0.0
  %356 = vmatpush1.msra.mxu0 0.0
  %357 = vmatprep.subr.mxu0 0.0
  %358 = vmatpush1.msra.mxu0 0.0
  %359 = vmatprep.subr.mxu0 0.0
  %360 = vmatpush1.msra.mxu0 0.0
  %361 = vmatprep.mubr.f32.mxu0 0.0
  %362 = vmatmul.mubr.f32.gmra.mrb[0].mxu0 %v38
  %v363 = vpop.f32.mrb[0].mxu0
  %v364 = vadd.f32 %v296, %v363
  %v365 = vpop.f32.mrb[0].mxu0
  %366 = vmatprep.mubr.f32.mxu0 0.0
  %367 = vmatmul.mubr.f32.gmra.mrb[0].mxu0 %v41
  %v368 = vpop.f32.mrb[0].mxu0
  %v369 = vadd.f32 %v296, %v368
  %v370 = vpop.f32.mrb[0].mxu0
  %371 = vdwg.mxu0
  %v372 = vmax.f32 %v364, 0.0
  %v373 = vmax.f32 %v369, 0.0
  %v375 = vsel %vm36, %v33, 0
  %377 = vmatprep.subr.mxu0 0.0
  %378 = vmatpush1.msra.mxu0 %v372
  %379 = vmatprep.subr.mxu0 0.0
  %380 = vmatpush1.msra.mxu0 %v373
  %381 = vmatprep.subr.mxu0 0.0
  %382 = vmatpush1.msra.mxu0 0.0
  %383 = vmatprep.subr.mxu0 0.0
  %384 = vmatpush1.msra.mxu0 0.0
  %385 = vmatprep.subr.mxu0 0.0
  %386 = vmatpush1.msra.mxu0 0.0
  %387 = vmatprep.subr.mxu0 0.0
  %388 = vmatpush1.msra.mxu0 0.0
  %389 = vmatprep.subr.mxu0 0.0
  %390 = vmatpush1.msra.mxu0 0.0
  %391 = vmatprep.subr.mxu0 0.0
  %392 = vmatpush1.msra.mxu0 0.0
  %393 = vmatprep.subr.mxu0 0.0
  %394 = vmatpush1.msra.mxu0 0.0
  %395 = vmatprep.subr.mxu0 0.0
  %396 = vmatpush1.msra.mxu0 0.0
  %397 = vmatprep.subr.mxu0 0.0
  %398 = vmatpush1.msra.mxu0 0.0
  %399 = vmatprep.subr.mxu0 0.0
  %400 = vmatpush1.msra.mxu0 0.0
  %401 = vmatprep.subr.mxu0 0.0
  %402 = vmatpush1.msra.mxu0 0.0
  %403 = vmatprep.subr.mxu0 0.0
  %404 = vmatpush1.msra.mxu0 0.0
  %405 = vmatprep.subr.mxu0 0.0
  %406 = vmatpush1.msra.mxu0 0.0
  %407 = vmatprep.subr.mxu0 0.0
  %408 = vmatpush1.msra.mxu0 0.0
  %409 = vmatprep.subr.mxu0 0.0
  %410 = vmatpush1.msra.mxu0 0.0
  %411 = vmatprep.subr.mxu0 0.0
  %412 = vmatpush1.msra.mxu0 0.0
  %413 = vmatprep.subr.mxu0 0.0
  %414 = vmatpush1.msra.mxu0 0.0
  %415 = vmatprep.subr.mxu0 0.0
  %416 = vmatpush1.msra.mxu0 0.0
  %417 = vmatprep.subr.mxu0 0.0
  %418 = vmatpush1.msra.mxu0 0.0
  %419 = vmatprep.subr.mxu0 0.0
  %420 = vmatpush1.msra.mxu0 0.0
  %421 = vmatprep.subr.mxu0 0.0
  %422 = vmatpush1.msra.mxu0 0.0
  %423 = vmatprep.subr.mxu0 0.0
  %424 = vmatpush1.msra.mxu0 0.0
  %425 = vmatprep.subr.mxu0 0.0
  %426 = vmatpush1.msra.mxu0 0.0
  %427 = vmatprep.subr.mxu0 0.0
  %428 = vmatpush1.msra.mxu0 0.0
  %429 = vmatprep.subr.mxu0 0.0
  %430 = vmatpush1.msra.mxu0 0.0
  %431 = vmatprep.subr.mxu0 0.0
  %432 = vmatpush1.msra.mxu0 0.0
  %433 = vmatprep.subr.mxu0 0.0
  %434 = vmatpush1.msra.mxu0 0.0
  %435 = vmatprep.subr.mxu0 0.0
  %436 = vmatpush1.msra.mxu0 0.0
  %437 = vmatprep.subr.mxu0 0.0
  %438 = vmatpush1.msra.mxu0 0.0
  %439 = vmatprep.subr.mxu0 0.0
  %440 = vmatpush1.msra.mxu0 0.0
  %441 = vmatprep.mubr.f32.mxu0 0.0
  %442 = vmatmul.mubr.f32.gmra.mrb[0].mxu0 %v375
  %v443 = vpop.f32.mrb[0].mxu0
  %v444 = vadd.f32 0.0, %v443
  %v445 = vpop.f32.mrb[0].mxu0
  %446 = vdwg.mxu0
  %v447 = vld [vmem:[%s6] sm:$0xff]
  %v448 = vld [vmem:[%s6 + $0x8] sm:$0xff]
  %v449 = vld [vmem:[%s6 + $0x10] sm:$0xff]
  %v450 = vld [vmem:[%s6 + $0x18] sm:$0xff]
  %v451 = vld [vmem:[%s7] sm:$0x1]
  %v453 = vlaneseq
  %v454 = vshrl.u32 %v453, 7
  %v455 = vsub.s32 0, %v454
  %v456 = vrot.slane %v451, %v455
  %v459 = vsel %vm211, %v444, 0
  %461 = vmatprep.subr.mxu0 0.0
  %462 = vmatpush1.msra.mxu0 %v447
  %463 = vmatprep.subr.mxu0 0.0
  %464 = vmatpush1.msra.mxu0 %v448
  %465 = vmatprep.subr.mxu0 0.0
  %466 = vmatpush1.msra.mxu0 %v449
  %467 = vmatprep.subr.mxu0 0.0
  %468 = vmatpush1.msra.mxu0 %v450
  %469 = vmatprep.subr.mxu0 0.0
  %470 = vmatpush1.msra.mxu0 0.0
  %471 = vmatprep.subr.mxu0 0.0
  %472 = vmatpush1.msra.mxu0 0.0
  %473 = vmatprep.subr.mxu0 0.0
  %474 = vmatpush1.msra.mxu0 0.0
  %475 = vmatprep.subr.mxu0 0.0
  %476 = vmatpush1.msra.mxu0 0.0
  %477 = vmatprep.subr.mxu0 0.0
  %478 = vmatpush1.msra.mxu0 0.0
  %479 = vmatprep.subr.mxu0 0.0
  %480 = vmatpush1.msra.mxu0 0.0
  %481 = vmatprep.subr.mxu0 0.0
  %482 = vmatpush1.msra.mxu0 0.0
  %483 = vmatprep.subr.mxu0 0.0
  %484 = vmatpush1.msra.mxu0 0.0
  %485 = vmatprep.subr.mxu0 0.0
  %486 = vmatpush1.msra.mxu0 0.0
  %487 = vmatprep.subr.mxu0 0.0
  %488 = vmatpush1.msra.mxu0 0.0
  %489 = vmatprep.subr.mxu0 0.0
  %490 = vmatpush1.msra.mxu0 0.0
  %491 = vmatprep.subr.mxu0 0.0
  %492 = vmatpush1.msra.mxu0 0.0
  %493 = vmatprep.subr.mxu0 0.0
  %494 = vmatpush1.msra.mxu0 0.0
  %495 = vmatprep.subr.mxu0 0.0
  %496 = vmatpush1.msra.mxu0 0.0
  %497 = vmatprep.subr.mxu0 0.0
  %498 = vmatpush1.msra.mxu0 0.0
  %499 = vmatprep.subr.mxu0 0.0
  %500 = vmatpush1.msra.mxu0 0.0
  %501 = vmatprep.subr.mxu0 0.0
  %502 = vmatpush1.msra.mxu0 0.0
  %503 = vmatprep.subr.mxu0 0.0
  %504 = vmatpush1.msra.mxu0 0.0
  %505 = vmatprep.subr.mxu0 0.0
  %506 = vmatpush1.msra.mxu0 0.0
  %507 = vmatprep.subr.mxu0 0.0
  %508 = vmatpush1.msra.mxu0 0.0
  %509 = vmatprep.subr.mxu0 0.0
  %510 = vmatpush1.msra.mxu0 0.0
  %511 = vmatprep.subr.mxu0 0.0
  %512 = vmatpush1.msra.mxu0 0.0
  %513 = vmatprep.subr.mxu0 0.0
  %514 = vmatpush1.msra.mxu0 0.0
  %515 = vmatprep.subr.mxu0 0.0
  %516 = vmatpush1.msra.mxu0 0.0
  %517 = vmatprep.subr.mxu0 0.0
  %518 = vmatpush1.msra.mxu0 0.0
  %519 = vmatprep.subr.mxu0 0.0
  %520 = vmatpush1.msra.mxu0 0.0
  %521 = vmatprep.subr.mxu0 0.0
  %522 = vmatpush1.msra.mxu0 0.0
  %523 = vmatprep.subr.mxu0 0.0
  %524 = vmatpush1.msra.mxu0 0.0
  %525 = vmatprep.mubr.f32.mxu0 0.0
  %526 = vmatmul.mubr.f32.gmra.mrb[0].mxu0 %v459
  %v527 = vpop.f32.mrb[0].mxu0
  %v528 = vadd.f32 %v456, %v527
  %v529 = vpop.f32.mrb[0].mxu0
  %530 = vdwg.mxu0
  %531 = vst [vmem:[%s8] sm:$0x3] %v528
  // Predicated region
  $region34: #{encoder_forward.1} parent=0 // pred_check
    _
  $region35: #{encoder_forward.1} parent=0 // pred_check_branch
    %533 = sbr.rel (0) target = $region37
  $region36: #{encoder_forward.1} parent=0 // pred_region
    _
  $region37: #{encoder_forward.1} parent=0 // pred_fallthru
    _
  // Predicated region
  $region38: #{encoder_forward.1} parent=0 // pred_check
    _
  $region39: #{encoder_forward.1} parent=0 // pred_check_branch
    %535 = sbr.rel (0) target = $region41
  $region40: #{encoder_forward.1} parent=0 // pred_region
    _
  $region41: #{encoder_forward.1} parent=0 // pred_fallthru
    _

</llo_original>
